<compile_context>
chip_gen: v6e
topology: v6e:2x2x1
jax: 0.10.0
libtpu: 0.0.40
codegen_flags: <defaults>
</compile_context>

<pallas_src>
import functools

import numpy as np
import jax
import jax.numpy as jnp
from jax import lax
from jax.experimental import pallas as pl
from jax.experimental.pallas import tpu as pltpu


# ---------------------------------------------------------------------------
# Level-operator construction (deterministic numpy glue, trace-time constants).
# ---------------------------------------------------------------------------

def _blur_downsample_matrix(n_in: int) -> np.ndarray:
    """1-D operator for ReflectionPad2d(1) + conv([1,3,3,1]/8, stride=2)."""
    f = np.array([1.0, 3.0, 3.0, 1.0], dtype=np.float64) / 8.0
    n_out = n_in // 2

    def refl(p):  # padded index -> original index (reflect pad of 1)
        if p == 0:
            return 1
        if p == n_in + 1:
            return n_in - 2
        return p - 1

    D = np.zeros((n_out, n_in), dtype=np.float64)
    for i in range(n_out):
        for a in range(4):
            D[i, refl(2 * i + a)] += f[a]
    return D


def _bilinear_upsample_matrix(n_in: int, n_out: int) -> np.ndarray:
    """1-D operator for F.interpolate(mode='bilinear', align_corners=False)."""
    scale = n_in / n_out
    U = np.zeros((n_out, n_in), dtype=np.float64)
    for d in range(n_out):
        src = max((d + 0.5) * scale - 0.5, 0.0)
        i0 = min(int(np.floor(src)), n_in - 1)
        i1 = i0 + 1 if i0 < n_in - 1 else i0
        w1 = src - i0
        U[d, i0] += 1.0 - w1
        U[d, i1] += w1
    return U


def _build_level_operators(H: int, W: int, num_levels: int):
    """Per-level 1-D operators Ah [D,H,H], Aw [D,W,W] with level_d = Ah[d] @ img @ Aw[d].T."""
    Ah = [np.eye(H)]
    Aw = [np.eye(W)]
    dh, dw = np.eye(H), np.eye(W)
    h, w = H, W
    for _ in range(1, num_levels):
        dh = _blur_downsample_matrix(h) @ dh
        dw = _blur_downsample_matrix(w) @ dw
        h //= 2
        w //= 2
        Ah.append(_bilinear_upsample_matrix(h, H) @ dh)
        Aw.append(_bilinear_upsample_matrix(w, W) @ dw)
    return (jnp.asarray(np.stack(Ah), jnp.float32),
            jnp.asarray(np.stack(Aw), jnp.float32))


def _reference_levels(gx, gy, H, W, max_num_levels, min_level):
    """Mipmap level field (replication-padded neighbour distances -> log2). Tiny VPU work."""
    cx = (W - 1.0) * (gx + 1.0) / 2.0
    cy = (H - 1.0) * (gy + 1.0) / 2.0
    coords = jnp.stack([cx, cy], axis=-1)
    cpad = jnp.pad(coords, ((0, 0), (1, 1), (1, 1), (0, 0)), mode="edge")
    cl = cpad[:, 1:-1, :-2]
    cr = cpad[:, 1:-1, 2:]
    cu = cpad[:, :-2, 1:-1]
    cd = cpad[:, 2:, 1:-1]

    def dist(o):
        return jnp.sqrt(jnp.clip(jnp.sum((o - coords) ** 2, axis=-1), 1.0, None))

    dmax = jnp.maximum(jnp.maximum(dist(cl), dist(cr)), jnp.maximum(dist(cu), dist(cd)))
    lv = jnp.clip(jnp.log2(dmax), 0.0, max_num_levels - 1.0)
    return jnp.maximum(lv, min_level)


def _plan_pixel_tiling(P, C, H, W, D, dot_bytes, batch):
    """Lane-dense pixel tile PT (multiple of 128) + padded pixel count.

    The budget counts the real per-tile live set (combined-weight slab + its f32
    outer-product temp, warped levels S, hat-blend temps, Rx/Ry, double-buffered
    input/output blocks) and stays under ~12 MiB so it fits the default scoped-VMEM
    limit on every generation (v5e 16 MiB, v6e/v7x 32 MiB) without extra flags."""
    def cdiv(a, b):
        return -(-a // b)

    per_col = (4 * (2 * H * W + D * C + 4 * C + H + W + 16)   # f32 temporaries per pixel column
               + dot_bytes * H * W)                           # weight slab in dot dtype
    fixed = 2 * D * C * H * W * dot_bytes                     # double-buffered stack block
    budget = 12 * 1024 * 1024
    pt_cap = max(128, (max(budget - fixed, per_col) // per_col) // 128 * 128)
    n_tiles = cdiv(P, pt_cap)
    # Keep >= ~4 total grid steps so both v7x TensorCores stay busy even at small batch.
    n_tiles = max(n_tiles, min(cdiv(4, max(batch, 1)), cdiv(P, 128)))
    pt = cdiv(cdiv(P, n_tiles), 128) * 128
    p_pad = pt * cdiv(P, pt)
    return pt, p_pad


# ---------------------------------------------------------------------------
# Pallas kernel: one (batch element, pixel tile) per grid step.
# ---------------------------------------------------------------------------

def _mipmap_warp_kernel(stk_ref, gx_ref, gy_ref, lev_ref, out_ref, *, C, H, W, D, dot_dtype):
    f32 = jnp.float32
    stk = stk_ref[0]                  # [D*C, H*W] in dot_dtype (precomputed level stack)
    gx = gx_ref[0]                    # [1, PT]
    gy = gy_ref[0]                    # [1, PT]
    lev = lev_ref[0]                  # [1, PT]
    PT = gx.shape[-1]

    # --- bilinear sampling weights (grid_sample border, align_corners=False) --------
    ix = jnp.clip(((gx + 1.0) * W - 1.0) * 0.5, 0.0, float(W - 1))
    iy = jnp.clip(((gy + 1.0) * H - 1.0) * 0.5, 0.0, float(H - 1))
    x0 = jnp.floor(ix)
    y0 = jnp.floor(iy)
    wx = ix - x0
    wy = iy - y0
    x0i = x0.astype(jnp.int32)
    y0i = y0.astype(jnp.int32)

    xi = lax.broadcasted_iota(jnp.int32, (W, 1), 0)
    yi = lax.broadcasted_iota(jnp.int32, (H, 1), 0)
    Rx = jnp.where(xi == x0i, 1.0 - wx, 0.0) + jnp.where(xi == x0i + 1, wx, 0.0)  # [W, PT]
    Ry = jnp.where(yi == y0i, 1.0 - wy, 0.0) + jnp.where(yi == y0i + 1, wy, 0.0)  # [H, PT]

    # --- combined (y,x) weight slab: K-packs the contraction to K = H*W --------------
    Wgt = (Ry[:, None, :] * Rx[None, :, :]).reshape(H * W, PT)                    # [H*W, PT]

    # --- single MXU matmul warps every channel of every level for every pixel --------
    S = jnp.dot(stk, Wgt.astype(dot_dtype), preferred_element_type=f32)           # [D*C, PT]

    # --- linear (hat) blend across stack levels, clamped to the available depth ------
    lev_c = jnp.clip(lev, 0.0, float(D - 1))                                      # [1, PT]
    acc = jnp.zeros((C, PT), dtype=f32)
    for d in range(D):
        w_d = jnp.maximum(1.0 - jnp.abs(lev_c - float(d)), 0.0)                   # [1, PT]
        acc = acc + w_d * S[d * C:(d + 1) * C, :]
    out_ref[0] = acc


# ---------------------------------------------------------------------------
# Wrapper
# ---------------------------------------------------------------------------

@functools.partial(jax.jit,
                   static_argnames=("max_num_levels", "min_level", "padding_mode", "dot_dtype"))
def mipmap_warp(inputs, grid, max_num_levels=8, min_level=0.0, padding_mode="border",
                dot_dtype=jnp.bfloat16):
    """Equivalent of MipmapWarp(max_num_levels).forward(inputs, grid, min_level).

    Returns (outputs [N,C,Ho,Wo], levels_map [N,Ho,Wo])."""
    assert padding_mode == "border"  # TODO(synk): 'zeros'/'reflection' padding modes not implemented.
    N, C, H, W = inputs.shape
    _, Ho, Wo, _ = grid.shape
    # TODO(synk): non-power-of-two spatial sizes need the reflect-pad branch of _create_stack.
    assert float(np.log2(W)).is_integer() and float(np.log2(H)).is_integer()

    gx = jnp.asarray(grid[..., 0], jnp.float32)
    gy = jnp.asarray(grid[..., 1], jnp.float32)

    # Mipmap level field (tiny elementwise work).
    levels = _reference_levels(gx, gy, H, W, max_num_levels, min_level)   # [N, Ho, Wo]

    # Static stack depth = feasible maximum; hat weights zero-out unused levels, so this
    # matches the data-dependent PyTorch depth without a device->host sync / recompiles.
    # TODO(synk): PyTorch errors if the required depth exceeds the feasible depth; here the
    # level field is clamped to the feasible depth instead.
    feasible = int(np.floor(np.log2(min(H, W)))) + 1
    D = max(1, min(int(max_num_levels), feasible))

    # Per-batch Gaussian level stack (once per call, tiny separable einsum), shipped in
    # the dot dtype so the kernel's big matmul LHS and its DMA are halved under bf16.
    Ah, Aw = _build_level_operators(H, W, D)                              # [D,H,H], [D,W,W]
    x = jnp.asarray(inputs, jnp.float32)
    stack = jnp.einsum("dhy,ncyx,dwx->ndchw", Ah, x, Aw,
                       precision=lax.Precision.HIGHEST)                    # [N,D,C,H,W]
    stack_flat = stack.reshape(N, D * C, H * W).astype(dot_dtype)

    P = Ho * Wo
    dot_bytes = int(jnp.dtype(dot_dtype).itemsize)
    PT, P_pad = _plan_pixel_tiling(P, C, H, W, D, dot_bytes, N)

    def flat_pad(a):
        a = a.reshape(N, 1, P)
        if P_pad > P:
            a = jnp.pad(a, ((0, 0), (0, 0), (0, P_pad - P)))
        return a

    gx_f, gy_f, lev_f = flat_pad(gx), flat_pad(gy), flat_pad(levels)

    kernel = functools.partial(_mipmap_warp_kernel, C=C, H=H, W=W, D=D, dot_dtype=dot_dtype)

    out_flat = pl.pallas_call(
        kernel,
        out_shape=jax.ShapeDtypeStruct((N, C, P_pad), jnp.float32),
        grid_spec=pltpu.PrefetchScalarGridSpec(
            num_scalar_prefetch=0,
            grid=(N, P_pad // PT),
            in_specs=[
                # Level stack block: index only changes at batch boundaries (no re-DMA
                # across the inner pixel-tile axis).
                pl.BlockSpec((1, D * C, H * W), lambda n, p: (n, 0, 0)),
                pl.BlockSpec((1, 1, PT), lambda n, p: (n, 0, p)),
                pl.BlockSpec((1, 1, PT), lambda n, p: (n, 0, p)),
                pl.BlockSpec((1, 1, PT), lambda n, p: (n, 0, p)),
            ],
            out_specs=pl.BlockSpec((1, C, PT), lambda n, p: (n, 0, p))),
        compiler_params=pltpu.CompilerParams(
            dimension_semantics=("parallel", "parallel")),
    )(stack_flat, gx_f, gy_f, lev_f)

    out = out_flat[:, :, :P].reshape(N, C, Ho, Wo)
    levels_map = levels / (max_num_levels - 1.0)
    return out, levels_map


# ---------------------------------------------------------------------------
# Plain-JAX reference (stack -> warp -> blend) for the demo correctness check.
# ---------------------------------------------------------------------------

def _reference_forward(inputs, grid, max_num_levels=8, min_level=0.0):
    N, C, H, W = inputs.shape
    _, Ho, Wo, _ = grid.shape
    gx = jnp.asarray(grid[..., 0], jnp.float32)
    gy = jnp.asarray(grid[..., 1], jnp.float32)
    levels = _reference_levels(gx, gy, H, W, max_num_levels, min_level)
    num_levels = int(np.ceil(float(jax.device_get(jnp.max(levels))))) + 1
    feasible = int(np.floor(np.log2(min(H, W)))) + 1
    num_levels = max(1, min(num_levels, max_num_levels, feasible))
    D = num_levels

    Ah, Aw = _build_level_operators(H, W, D)
    x = jnp.asarray(inputs, jnp.float32)
    stack = jnp.einsum("dhy,ncyx,dwx->ncdhw", Ah, x, Aw,
                       precision=lax.Precision.HIGHEST)                    # [N,C,D,H,W]

    ix = jnp.clip(((gx + 1.0) * W - 1.0) * 0.5, 0.0, float(W - 1))
    iy = jnp.clip(((gy + 1.0) * H - 1.0) * 0.5, 0.0, float(H - 1))
    x0 = jnp.floor(ix)
    y0 = jnp.floor(iy)
    wx = (ix - x0)[:, None, None, :, :]
    wy = (iy - y0)[:, None, None, :, :]
    x0i = x0.astype(jnp.int32)
    y0i = y0.astype(jnp.int32)
    x1i = jnp.minimum(x0i + 1, W - 1)
    y1i = jnp.minimum(y0i + 1, H - 1)

    flat = stack.reshape(N, C, D, H * W)

    def gather(yy, xx):
        idx = (yy * W + xx).reshape(N, 1, 1, Ho * Wo)
        g = jnp.take_along_axis(flat, jnp.broadcast_to(idx, (N, C, D, Ho * Wo)), axis=3)
        return g.reshape(N, C, D, Ho, Wo)

    v00 = gather(y0i, x0i)
    v01 = gather(y0i, x1i)
    v10 = gather(y1i, x0i)
    v11 = gather(y1i, x1i)
    warped = (v00 * (1.0 - wy) * (1.0 - wx) + v01 * (1.0 - wy) * wx
              + v10 * wy * (1.0 - wx) + v11 * wy * wx)            # [N,C,D,Ho,Wo]

    lev_b = jnp.clip(levels, 0.0, num_levels - 1.0)[:, None, None, :, :]
    dval = jnp.arange(num_levels, dtype=jnp.float32)[None, None, :, None, None]
    hat = jnp.maximum(1.0 - jnp.abs(lev_b - dval), 0.0)
    out = jnp.sum(warped * hat, axis=2)
    return out, levels / (max_num_levels - 1.0)


# ---------------------------------------------------------------------------
# Demo
# ---------------------------------------------------------------------------

if __name__ == "__main__":
    key = jax.random.PRNGKey(0)
    k1, k2 = jax.random.split(key)
    N, C, H, W = 2, 4, 16, 16
    MAX_LEVELS = 8

    inputs = jax.random.normal(k1, (N, C, H, W), dtype=jnp.float32)

    # Sampling grid: batch 0 ~ identity-ish, batch 1 zoomed out 2.5x (exercises several
    # mipmap levels), both with a small deterministic perturbation.
    ys = jnp.linspace(-1.0, 1.0, H)
    xs = jnp.linspace(-1.0, 1.0, W)
    gy_b, gx_b = jnp.meshgrid(ys, xs, indexing="ij")
    base = jnp.stack([gx_b, gy_b], axis=-1)                              # [H, W, 2]
    zoom = jnp.array([1.0, 2.5], dtype=jnp.float32)[:, None, None, None]
    grid = base[None] * zoom + 0.03 * jax.random.normal(k2, (N, H, W, 2), dtype=jnp.float32)

    # Exact path (f32 MXU operands).
    out_f32, levels_map = mipmap_warp(inputs, grid, max_num_levels=MAX_LEVELS,
                                      dot_dtype=jnp.float32)
    # Fast default path (bf16 MXU operands, f32 accumulation).
    out_bf16, _ = mipmap_warp(inputs, grid, max_num_levels=MAX_LEVELS)
    out_f32, out_bf16, levels_map = jax.block_until_ready((out_f32, out_bf16, levels_map))

    ref_out, ref_lvl = _reference_forward(inputs, grid, MAX_LEVELS, 0.0)

    assert out_f32.shape == (N, C, H, W)
    assert out_bf16.shape == (N, C, H, W)
    assert levels_map.shape == (N, H, W)
    assert bool(jnp.all(jnp.isfinite(out_f32)))
    assert bool(jnp.all(jnp.isfinite(out_bf16)))
    assert float(jnp.max(jnp.abs(out_f32 - ref_out))) < 1e-3
    # bf16 operands (8-bit mantissa) with f32 accumulation: bounded by a few e-2 absolute.
    assert float(jnp.max(jnp.abs(out_bf16 - ref_out))) < 5e-2
    assert float(jnp.max(jnp.abs(levels_map - ref_lvl))) < 1e-5

    print("KERNEL_OK")
</pallas_src>

<mosaic_0001>
module attributes {stable_mosaic.version = 11 : i64} {
  func.func @_mipmap_warp_kernel(%arg0: i32, %arg1: i32, %arg2: memref<1x20x256xf32, #tpu.memory_space<vmem>>, %arg3: memref<1x1x128xf32, #tpu.memory_space<vmem>>, %arg4: memref<1x1x128xf32, #tpu.memory_space<vmem>>, %arg5: memref<1x1x128xf32, #tpu.memory_space<vmem>>, %arg6: memref<1x4x128xf32, #tpu.memory_space<vmem>>) attributes {dimension_semantics = [#tpu.dimension_semantics<parallel>, #tpu.dimension_semantics<parallel>], iteration_bounds = array<i64: 2, 2>, scalar_prefetch = 0 : i64, scratch_operands = 0 : i64, tpu.core_type = #tpu.core_type<tc>, window_params = [{transform_indices = @transform_0, window_bounds = array<i64: 1, 20, 256>}, {transform_indices = @transform_1, window_bounds = array<i64: 1, 1, 128>}, {transform_indices = @transform_2, window_bounds = array<i64: 1, 1, 128>}, {transform_indices = @transform_3, window_bounds = array<i64: 1, 1, 128>}, {transform_indices = @transform_4, window_bounds = array<i64: 1, 4, 128>}]} {
    %c0 = arith.constant 0 : index
    %c0_0 = arith.constant 0 : index
    %c0_1 = arith.constant 0 : index
    %0 = vector.load %arg2[%c0, %c0_0, %c0_1] : memref<1x20x256xf32, #tpu.memory_space<vmem>>, vector<1x20x256xf32>
    %1 = vector.shape_cast %0 : vector<1x20x256xf32> to vector<20x256xf32>
    %c0_2 = arith.constant 0 : index
    %c0_3 = arith.constant 0 : index
    %c0_4 = arith.constant 0 : index
    %2 = vector.load %arg3[%c0_2, %c0_3, %c0_4] : memref<1x1x128xf32, #tpu.memory_space<vmem>>, vector<1x1x128xf32>
    %3 = vector.shape_cast %2 : vector<1x1x128xf32> to vector<1x128xf32>
    %c0_5 = arith.constant 0 : index
    %c0_6 = arith.constant 0 : index
    %c0_7 = arith.constant 0 : index
    %4 = vector.load %arg4[%c0_5, %c0_6, %c0_7] : memref<1x1x128xf32, #tpu.memory_space<vmem>>, vector<1x1x128xf32>
    %5 = vector.shape_cast %4 : vector<1x1x128xf32> to vector<1x128xf32>
    %c0_8 = arith.constant 0 : index
    %c0_9 = arith.constant 0 : index
    %c0_10 = arith.constant 0 : index
    %6 = vector.load %arg5[%c0_8, %c0_9, %c0_10] : memref<1x1x128xf32, #tpu.memory_space<vmem>>, vector<1x1x128xf32>
    %7 = vector.shape_cast %6 : vector<1x1x128xf32> to vector<1x128xf32>
    %cst = arith.constant 1.000000e+00 : f32
    %8 = vector.broadcast %cst : f32 to vector<1x128xf32>
    %9 = arith.addf %3, %8 : vector<1x128xf32>
    %cst_11 = arith.constant 1.600000e+01 : f32
    %10 = vector.broadcast %cst_11 : f32 to vector<1x128xf32>
    %11 = arith.mulf %9, %10 : vector<1x128xf32>
    %cst_12 = arith.constant 1.000000e+00 : f32
    %12 = vector.broadcast %cst_12 : f32 to vector<1x128xf32>
    %13 = arith.subf %11, %12 : vector<1x128xf32>
    %cst_13 = arith.constant 5.000000e-01 : f32
    %14 = vector.broadcast %cst_13 : f32 to vector<1x128xf32>
    %15 = arith.mulf %13, %14 : vector<1x128xf32>
    %cst_14 = arith.constant 0.000000e+00 : f32
    %cst_15 = arith.constant 1.500000e+01 : f32
    %16 = vector.broadcast %cst_14 : f32 to vector<1x128xf32>
    %17 = arith.maximumf %16, %15 : vector<1x128xf32>
    %18 = vector.broadcast %cst_15 : f32 to vector<1x128xf32>
    %19 = arith.minimumf %18, %17 : vector<1x128xf32>
    %cst_16 = arith.constant 1.000000e+00 : f32
    %20 = vector.broadcast %cst_16 : f32 to vector<1x128xf32>
    %21 = arith.addf %5, %20 : vector<1x128xf32>
    %cst_17 = arith.constant 1.600000e+01 : f32
    %22 = vector.broadcast %cst_17 : f32 to vector<1x128xf32>
    %23 = arith.mulf %21, %22 : vector<1x128xf32>
    %cst_18 = arith.constant 1.000000e+00 : f32
    %24 = vector.broadcast %cst_18 : f32 to vector<1x128xf32>
    %25 = arith.subf %23, %24 : vector<1x128xf32>
    %cst_19 = arith.constant 5.000000e-01 : f32
    %26 = vector.broadcast %cst_19 : f32 to vector<1x128xf32>
    %27 = arith.mulf %25, %26 : vector<1x128xf32>
    %cst_20 = arith.constant 0.000000e+00 : f32
    %cst_21 = arith.constant 1.500000e+01 : f32
    %28 = vector.broadcast %cst_20 : f32 to vector<1x128xf32>
    %29 = arith.maximumf %28, %27 : vector<1x128xf32>
    %30 = vector.broadcast %cst_21 : f32 to vector<1x128xf32>
    %31 = arith.minimumf %30, %29 : vector<1x128xf32>
    %32 = math.floor %19 : vector<1x128xf32>
    %33 = math.floor %31 : vector<1x128xf32>
    %34 = arith.subf %19, %32 : vector<1x128xf32>
    %35 = arith.subf %31, %33 : vector<1x128xf32>
    %36 = arith.fptosi %32 : vector<1x128xf32> to vector<1x128xi32>
    %37 = arith.fptosi %33 : vector<1x128xf32> to vector<1x128xi32>
    %38 = tpu.iota {dimensions = array<i32: 0>} : vector<16x1xi32>
    %39 = tpu.iota {dimensions = array<i32: 0>} : vector<16x1xi32>
    %40 = vector.broadcast %38 : vector<16x1xi32> to vector<16x128xi32>
    %41 = vector.broadcast %36 : vector<1x128xi32> to vector<16x128xi32>
    %42 = arith.cmpi eq, %40, %41 : vector<16x128xi32>
    %cst_22 = arith.constant 1.000000e+00 : f32
    %43 = vector.broadcast %cst_22 : f32 to vector<1x128xf32>
    %44 = arith.subf %43, %34 : vector<1x128xf32>
    %cst_23 = arith.constant 0.000000e+00 : f32
    %45 = vector.shape_cast %44 : vector<1x128xf32> to vector<1x128xf32>
    %46 = vector.broadcast %45 : vector<1x128xf32> to vector<16x128xf32>
    %47 = vector.broadcast %cst_23 : f32 to vector<16x128xf32>
    %48 = arith.select %42, %46, %47 : vector<16x128xi1>, vector<16x128xf32>
    %c1_i32 = arith.constant 1 : i32
    %49 = vector.broadcast %c1_i32 : i32 to vector<1x128xi32>
    %50 = arith.addi %36, %49 : vector<1x128xi32>
    %51 = vector.broadcast %38 : vector<16x1xi32> to vector<16x128xi32>
    %52 = vector.broadcast %50 : vector<1x128xi32> to vector<16x128xi32>
    %53 = arith.cmpi eq, %51, %52 : vector<16x128xi32>
    %cst_24 = arith.constant 0.000000e+00 : f32
    %54 = vector.shape_cast %34 : vector<1x128xf32> to vector<1x128xf32>
    %55 = vector.broadcast %54 : vector<1x128xf32> to vector<16x128xf32>
    %56 = vector.broadcast %cst_24 : f32 to vector<16x128xf32>
    %57 = arith.select %53, %55, %56 : vector<16x128xi1>, vector<16x128xf32>
    %58 = arith.addf %48, %57 : vector<16x128xf32>
    %59 = vector.broadcast %39 : vector<16x1xi32> to vector<16x128xi32>
    %60 = vector.broadcast %37 : vector<1x128xi32> to vector<16x128xi32>
    %61 = arith.cmpi eq, %59, %60 : vector<16x128xi32>
    %cst_25 = arith.constant 1.000000e+00 : f32
    %62 = vector.broadcast %cst_25 : f32 to vector<1x128xf32>
    %63 = arith.subf %62, %35 : vector<1x128xf32>
    %cst_26 = arith.constant 0.000000e+00 : f32
    %64 = vector.shape_cast %63 : vector<1x128xf32> to vector<1x128xf32>
    %65 = vector.broadcast %64 : vector<1x128xf32> to vector<16x128xf32>
    %66 = vector.broadcast %cst_26 : f32 to vector<16x128xf32>
    %67 = arith.select %61, %65, %66 : vector<16x128xi1>, vector<16x128xf32>
    %c1_i32_27 = arith.constant 1 : i32
    %68 = vector.broadcast %c1_i32_27 : i32 to vector<1x128xi32>
    %69 = arith.addi %37, %68 : vector<1x128xi32>
    %70 = vector.broadcast %39 : vector<16x1xi32> to vector<16x128xi32>
    %71 = vector.broadcast %69 : vector<1x128xi32> to vector<16x128xi32>
    %72 = arith.cmpi eq, %70, %71 : vector<16x128xi32>
    %cst_28 = arith.constant 0.000000e+00 : f32
    %73 = vector.shape_cast %35 : vector<1x128xf32> to vector<1x128xf32>
    %74 = vector.broadcast %73 : vector<1x128xf32> to vector<16x128xf32>
    %75 = vector.broadcast %cst_28 : f32 to vector<16x128xf32>
    %76 = arith.select %72, %74, %75 : vector<16x128xi1>, vector<16x128xf32>
    %77 = arith.addf %67, %76 : vector<16x128xf32>
    %78 = vector.shape_cast %77 : vector<16x128xf32> to vector<16x1x128xf32>
    %79 = vector.shape_cast %58 : vector<16x128xf32> to vector<1x16x128xf32>
    %80 = vector.broadcast %78 : vector<16x1x128xf32> to vector<16x16x128xf32>
    %81 = vector.broadcast %79 : vector<1x16x128xf32> to vector<16x16x128xf32>
    %82 = arith.mulf %80, %81 : vector<16x16x128xf32>
    %83 = vector.shape_cast %82 : vector<16x16x128xf32> to vector<256x128xf32>
    %cst_29 = arith.constant dense<0.000000e+00> : vector<20x128xf32>
    %84 = tpu.matmul %1, %83, %cst_29 {dimension_numbers = #tpu.dot_dimension_numbers<[1], [0], [0], [1], [0, 0, 1, 1], [], []>} : vector<20x256xf32>, vector<256x128xf32>, vector<20x128xf32> -> vector<20x128xf32>
    %cst_30 = arith.constant 0.000000e+00 : f32
    %cst_31 = arith.constant 4.000000e+00 : f32
    %85 = vector.broadcast %cst_30 : f32 to vector<1x128xf32>
    %86 = arith.maximumf %85, %7 : vector<1x128xf32>
    %87 = vector.broadcast %cst_31 : f32 to vector<1x128xf32>
    %88 = arith.minimumf %87, %86 : vector<1x128xf32>
    %cst_32 = arith.constant 0.000000e+00 : f32
    %89 = vector.broadcast %cst_32 : f32 to vector<4x128xf32>
    %cst_33 = arith.constant 0.000000e+00 : f32
    %90 = vector.broadcast %cst_33 : f32 to vector<1x128xf32>
    %91 = arith.subf %88, %90 : vector<1x128xf32>
    %92 = math.absf %91 : vector<1x128xf32>
    %cst_34 = arith.constant 1.000000e+00 : f32
    %93 = vector.broadcast %cst_34 : f32 to vector<1x128xf32>
    %94 = arith.subf %93, %92 : vector<1x128xf32>
    %cst_35 = arith.constant 0.000000e+00 : f32
    %95 = vector.broadcast %cst_35 : f32 to vector<1x128xf32>
    %96 = arith.maximumf %94, %95 : vector<1x128xf32>
    %97 = vector.extract_strided_slice %84 {offsets = [0, 0], sizes = [4, 128], strides = [1, 1]} : vector<20x128xf32> to vector<4x128xf32>
    %98 = vector.broadcast %96 : vector<1x128xf32> to vector<4x128xf32>
    %99 = arith.mulf %98, %97 : vector<4x128xf32>
    %100 = arith.addf %89, %99 : vector<4x128xf32>
    %cst_36 = arith.constant 1.000000e+00 : f32
    %101 = vector.broadcast %cst_36 : f32 to vector<1x128xf32>
    %102 = arith.subf %88, %101 : vector<1x128xf32>
    %103 = math.absf %102 : vector<1x128xf32>
    %cst_37 = arith.constant 1.000000e+00 : f32
    %104 = vector.broadcast %cst_37 : f32 to vector<1x128xf32>
    %105 = arith.subf %104, %103 : vector<1x128xf32>
    %cst_38 = arith.constant 0.000000e+00 : f32
    %106 = vector.broadcast %cst_38 : f32 to vector<1x128xf32>
    %107 = arith.maximumf %105, %106 : vector<1x128xf32>
    %108 = vector.extract_strided_slice %84 {offsets = [4, 0], sizes = [4, 128], strides = [1, 1]} : vector<20x128xf32> to vector<4x128xf32>
    %109 = vector.broadcast %107 : vector<1x128xf32> to vector<4x128xf32>
    %110 = arith.mulf %109, %108 : vector<4x128xf32>
    %111 = arith.addf %100, %110 : vector<4x128xf32>
    %cst_39 = arith.constant 2.000000e+00 : f32
    %112 = vector.broadcast %cst_39 : f32 to vector<1x128xf32>
    %113 = arith.subf %88, %112 : vector<1x128xf32>
    %114 = math.absf %113 : vector<1x128xf32>
    %cst_40 = arith.constant 1.000000e+00 : f32
    %115 = vector.broadcast %cst_40 : f32 to vector<1x128xf32>
    %116 = arith.subf %115, %114 : vector<1x128xf32>
    %cst_41 = arith.constant 0.000000e+00 : f32
    %117 = vector.broadcast %cst_41 : f32 to vector<1x128xf32>
    %118 = arith.maximumf %116, %117 : vector<1x128xf32>
    %119 = vector.extract_strided_slice %84 {offsets = [8, 0], sizes = [4, 128], strides = [1, 1]} : vector<20x128xf32> to vector<4x128xf32>
    %120 = vector.broadcast %118 : vector<1x128xf32> to vector<4x128xf32>
    %121 = arith.mulf %120, %119 : vector<4x128xf32>
    %122 = arith.addf %111, %121 : vector<4x128xf32>
    %cst_42 = arith.constant 3.000000e+00 : f32
    %123 = vector.broadcast %cst_42 : f32 to vector<1x128xf32>
    %124 = arith.subf %88, %123 : vector<1x128xf32>
    %125 = math.absf %124 : vector<1x128xf32>
    %cst_43 = arith.constant 1.000000e+00 : f32
    %126 = vector.broadcast %cst_43 : f32 to vector<1x128xf32>
    %127 = arith.subf %126, %125 : vector<1x128xf32>
    %cst_44 = arith.constant 0.000000e+00 : f32
    %128 = vector.broadcast %cst_44 : f32 to vector<1x128xf32>
    %129 = arith.maximumf %127, %128 : vector<1x128xf32>
    %130 = vector.extract_strided_slice %84 {offsets = [12, 0], sizes = [4, 128], strides = [1, 1]} : vector<20x128xf32> to vector<4x128xf32>
    %131 = vector.broadcast %129 : vector<1x128xf32> to vector<4x128xf32>
    %132 = arith.mulf %131, %130 : vector<4x128xf32>
    %133 = arith.addf %122, %132 : vector<4x128xf32>
    %cst_45 = arith.constant 4.000000e+00 : f32
    %134 = vector.broadcast %cst_45 : f32 to vector<1x128xf32>
    %135 = arith.subf %88, %134 : vector<1x128xf32>
    %136 = math.absf %135 : vector<1x128xf32>
    %cst_46 = arith.constant 1.000000e+00 : f32
    %137 = vector.broadcast %cst_46 : f32 to vector<1x128xf32>
    %138 = arith.subf %137, %136 : vector<1x128xf32>
    %cst_47 = arith.constant 0.000000e+00 : f32
    %139 = vector.broadcast %cst_47 : f32 to vector<1x128xf32>
    %140 = arith.maximumf %138, %139 : vector<1x128xf32>
    %141 = vector.extract_strided_slice %84 {offsets = [16, 0], sizes = [4, 128], strides = [1, 1]} : vector<20x128xf32> to vector<4x128xf32>
    %142 = vector.broadcast %140 : vector<1x128xf32> to vector<4x128xf32>
    %143 = arith.mulf %142, %141 : vector<4x128xf32>
    %144 = arith.addf %133, %143 : vector<4x128xf32>
    %c0_48 = arith.constant 0 : index
    %c0_49 = arith.constant 0 : index
    %c0_50 = arith.constant 0 : index
    %145 = vector.load %arg6[%c0_48, %c0_49, %c0_50] : memref<1x4x128xf32, #tpu.memory_space<vmem>>, vector<1x4x128xf32>
    %146 = vector.shape_cast %145 : vector<1x4x128xf32> to vector<4x128xf32>
    %147 = vector.shape_cast %144 : vector<4x128xf32> to vector<1x4x128xf32>
    tpu.vector_store %arg6[%c0_48, %c0_49, %c0_50], %147 {strides = array<i32>} : memref<1x4x128xf32, #tpu.memory_space<vmem>>, vector<1x4x128xf32>,
    return
  }
  func.func @transform_0(%arg0: i32, %arg1: i32) -> (i32, i32, i32) {
    %c0_i32 = arith.constant 0 : i32
    %c0_i32_0 = arith.constant 0 : i32
    %c0_i32_1 = arith.constant 0 : i32
    return %arg0, %c0_i32, %c0_i32_0 : i32, i32, i32
  }
  func.func @transform_1(%arg0: i32, %arg1: i32) -> (i32, i32, i32) {
    %c0_i32 = arith.constant 0 : i32
    %c0_i32_0 = arith.constant 0 : i32
    return %arg0, %c0_i32, %arg1 : i32, i32, i32
  }
  func.func @transform_2(%arg0: i32, %arg1: i32) -> (i32, i32, i32) {
    %c0_i32 = arith.constant 0 : i32
    %c0_i32_0 = arith.constant 0 : i32
    return %arg0, %c0_i32, %arg1 : i32, i32, i32
  }
  func.func @transform_3(%arg0: i32, %arg1: i32) -> (i32, i32, i32) {
    %c0_i32 = arith.constant 0 : i32
    %c0_i32_0 = arith.constant 0 : i32
    return %arg0, %c0_i32, %arg1 : i32, i32, i32
  }
  func.func @transform_4(%arg0: i32, %arg1: i32) -> (i32, i32, i32) {
    %c0_i32 = arith.constant 0 : i32
    %c0_i32_0 = arith.constant 0 : i32
    return %arg0, %c0_i32, %arg1 : i32, i32, i32
  }
}

</mosaic_0001>

<llo_original>
// kernel: squeeze.0
$region0: #{squeeze.0}
  %s0 = inlined_call_operand.vmem [shape: f32[2,16,16], index: 0, kind: input, shape index: {}]
  %s1 = inlined_call_operand.vmem [shape: f32[2,1,256], index: 1, kind: output, shape index: {}]
  $region1: #{squeeze.0} parent=0
    #allocation0 [shape = 'u8[16384]{0}', space=vmem, size = 0x4000, scoped, tag = 'scoped mem for output reshape']
    %v2 = vld [vmem:[%s0] ss:$8 sm:$0xf]
    %vm3 = vcmask 130048
    %4 = vst.msk [vmem:[#allocation0] ss:$8 sm:$0xf] %vm3, %v2
    %s5 = scalar_lea.vmem %s0, 7
    %v6 = vld [vmem:[%s5] ss:$8 sm:$0xf]
    %7 = vrot.lane.b32.xlu0 %v6, 112
    %v8 = vpop.permute.xlu0 %7
    %vm9 = vcmask 1048448
    %10 = vst.msk [vmem:[#allocation0] ss:$8 sm:$0xf] %vm9, %v8
    %s11 = scalar_lea.vmem %s0, 6
    %v12 = vld [vmem:[%s11] ss:$8 sm:$0xf]
    %13 = vrot.lane.b32.xlu0 %v12, 96
    %v14 = vpop.permute.xlu0 %13
    %vm15 = vcmask 917248
    %16 = vst.msk [vmem:[#allocation0] ss:$8 sm:$0xf] %vm15, %v14
    %s17 = scalar_lea.vmem %s0, 5
    %v18 = vld [vmem:[%s17] ss:$8 sm:$0xf]
    %19 = vrot.lane.b32.xlu0 %v18, 80
    %v20 = vpop.permute.xlu0 %19
    %vm21 = vcmask 786048
    %22 = vst.msk [vmem:[#allocation0] ss:$8 sm:$0xf] %vm21, %v20
    %s23 = scalar_lea.vmem %s0, 4
    %v24 = vld [vmem:[%s23] ss:$8 sm:$0xf]
    %25 = vrot.lane.b32.xlu0 %v24, 64
    %v26 = vpop.permute.xlu0 %25
    %vm27 = vcmask 654848
    %28 = vst.msk [vmem:[#allocation0] ss:$8 sm:$0xf] %vm27, %v26
    %s29 = scalar_lea.vmem %s0, 3
    %v30 = vld [vmem:[%s29] ss:$8 sm:$0xf]
    %31 = vrot.lane.b32.xlu0 %v30, 48
    %v32 = vpop.permute.xlu0 %31
    %vm33 = vcmask 523648
    %34 = vst.msk [vmem:[#allocation0] ss:$8 sm:$0xf] %vm33, %v32
    %s35 = scalar_lea.vmem %s0, 2
    %v36 = vld [vmem:[%s35] ss:$8 sm:$0xf]
    %37 = vrot.lane.b32.xlu0 %v36, 32
    %v38 = vpop.permute.xlu0 %37
    %vm39 = vcmask 392448
    %40 = vst.msk [vmem:[#allocation0] ss:$8 sm:$0xf] %vm39, %v38
    %s41 = scalar_lea.vmem %s0, 1
    %v42 = vld [vmem:[%s41] ss:$8 sm:$0xf]
    %43 = vrot.lane.b32.xlu0 %v42, 16
    %v44 = vpop.permute.xlu0 %43
    %vm45 = vcmask 261248
    %46 = vst.msk [vmem:[#allocation0] ss:$8 sm:$0xf] %vm45, %v44
    %s48 = sshll.u32 1, 1
    %s49 = ssub.s32 %s48, 1
    %v51 = vld [vmem:[#allocation0] sm:%s49]
    %s52 = sshll.u32 1, 1
    %s53 = ssub.s32 %s52, 1
    %54 = vst [vmem:[%s1] sm:%s53] %v51
    %s55 = scalar_lea.vmem [#allocation0], 8
    %v56 = vld [vmem:[%s55] sm:%s49]
    %s57 = sshll.u32 1, 1
    %s58 = ssub.s32 %s57, 1
    %s59 = scalar_lea.vmem %s1, 1
    %60 = vst [vmem:[%s59] sm:%s58] %v56
    %s61 = scalar_lea.vmem [#allocation0], 16
    %v62 = vld [vmem:[%s61] sm:%s49]
    %s63 = sshll.u32 1, 1
    %s64 = ssub.s32 %s63, 1
    %s65 = smul.addr 1, 2
    %s66 = scalar_lea.vmem %s1, %s65
    %67 = vst [vmem:[%s66] sm:%s64] %v62
    %s68 = scalar_lea.vmem [#allocation0], 24
    %v69 = vld [vmem:[%s68] sm:%s49]
    %s70 = sshll.u32 1, 1
    %s71 = ssub.s32 %s70, 1
    %s72 = smul.addr 1, 3
    %s73 = scalar_lea.vmem %s1, %s72
    %74 = vst [vmem:[%s73] sm:%s71] %v69

// kernel: mipmap_warp.1
$region0: #{mipmap_warp.1}
  #allocation0 [shape = 'u32[]', space=smem, size = 0x4, offset = 0x4, fixed_abs, tag = 'smem constant byte address 0x4 - core index']
  #allocation1 [shape = 'u32[144,128]{1,0:T(1,128)}', space=vmem, size = 0x12000, scoped, tag = 'internal scratch']
  %s0 = inlined_call_operand.vmem [shape: f32[2,20,256], index: 0, kind: input, shape index: {}]
  %s1 = inlined_call_operand.vmem [shape: f32[2,1,256], index: 1, kind: input, shape index: {}]
  %s2 = inlined_call_operand.vmem [shape: f32[2,1,256], index: 2, kind: input, shape index: {}]
  %s3 = inlined_call_operand.vmem [shape: f32[2,1,256], index: 3, kind: input, shape index: {}]
  %s4 = inlined_call_operand.vmem [shape: f32[2,4,256], index: 4, kind: output, shape index: {}]
  %s5 = sld [smem:[#allocation0]]
  $region49: #{mipmap_warp.1} parent=0
    _
  %s7 = ssub.s32 1, %s5
  %s8 = scalar_select 0, %s7, %s5
  loop: start=0, step=1, limit=6
  $region2: #{mipmap_warp.1} parent=0 // loop_pre_header
    _
  $region3: #{mipmap_warp.1} parent=0 // loop_header
    %s10 = sphi 0, %s14
    %p11 = scmp.ge.s32.totalorder %s10, 6
    %s17 = sphi 0, %s29
    %s18 = sphi 0, %s25
    %s19 = sphi 0, %s17
    %s20 = sphi 0, %s18
    %s21 = sphi 0, %s19
    %s22 = sphi 0, %s20
    %s32 = sphi 0, %s34
    %s35 = sphi 0, %s32
    %s36 = sphi 0, %s35
    %s52 = sphi 0, %s36
    %s60 = sphi 0, %s62
    %s63 = sphi 0, %s60
    %s64 = sphi 0, %s63
    %s80 = sphi 0, %s64
    %s88 = sphi 0, %s90
    %s91 = sphi 0, %s88
    %s92 = sphi 0, %s91
    %s108 = sphi 0, %s92
    %s116 = sphi 0, %s118
    %s119 = sphi 0, %s116
    %s120 = sphi 0, %s119
    %s136 = sphi 0, %s120
    %s144 = sphi 0, %s146
    %s147 = sphi 0, %s144
    %s148 = sphi 0, %s147
    %s164 = sphi 0, %s148
  $region4: #{mipmap_warp.1} parent=0 // loop_header_branch
    %13 = sbr.rel (%p11) target = $region8
  $region5: #{mipmap_warp.1} parent=0 // loop_body
    %s15 = ssub.s32 %s10, 1
    %s16 = ssub.s32 %s10, 2
    %s23 = sadd.s32 1, %s18
    %p24 = scmp.ge.s32.totalorder %s23, 2
    %s25 = scalar_select %p24, 0, %s23
    %s26 = sadd.s32 1, %s17
    %s27 = scalar_select %p24, %s26, %s17
    %p28 = scmp.ge.s32.totalorder %s27, 2
    %s29 = scalar_select %p28, 0, %s27
    %s30 = ssub.s32 %s17, %s29
    %p31 = scmp.eq.s32.totalorder %s30, 0
    %s33 = sadd.s32 %s32, 1
    %s34 = scalar_select %p31, %s32, %s33
    %p37 = pneg %p31
    %p38 = scmp.eq.s32.totalorder %s10, 3
    %p39 = por %p37, %p38
    %p40 = scmp.ne.s32.totalorder %s32, %s35
    %p41 = scmp.eq.s32.totalorder %s10, 0
    %p42 = por %p40, %p41
    %p43 = scmp.ne.s32.totalorder %s32, %s35
    %p44 = scmp.eq.s32.totalorder %s15, 3
    %p45 = por %p43, %p44
    %p46 = scmp.ne.s32.totalorder %s35, %s36
    %p47 = scmp.eq.s32.totalorder %s15, 0
    %p48 = por %p46, %p47
    %p49 = scmp.ne.s32.totalorder %s35, %s36
    %p50 = scmp.eq.s32.totalorder %s16, 3
    %p51 = por %p49, %p50
    %p53 = scmp.ne.s32.totalorder %s36, %s52
    %p54 = scmp.eq.s32.totalorder %s16, 0
    %p55 = por %p53, %p54
    %s56 = ssub.s32 %s17, %s29
    %s57 = ssub.s32 %s18, %s25
    %s58 = sor.u32 %s56, %s57
    %p59 = scmp.eq.s32.totalorder %s58, 0
    %s61 = sadd.s32 %s60, 1
    %s62 = scalar_select %p59, %s60, %s61
    %p65 = pneg %p59
    %p66 = scmp.eq.s32.totalorder %s10, 3
    %p67 = por %p65, %p66
    %p68 = scmp.ne.s32.totalorder %s60, %s63
    %p69 = scmp.eq.s32.totalorder %s10, 0
    %p70 = por %p68, %p69
    %p71 = scmp.ne.s32.totalorder %s60, %s63
    %p72 = scmp.eq.s32.totalorder %s15, 3
    %p73 = por %p71, %p72
    %p74 = scmp.ne.s32.totalorder %s63, %s64
    %p75 = scmp.eq.s32.totalorder %s15, 0
    %p76 = por %p74, %p75
    %p77 = scmp.ne.s32.totalorder %s63, %s64
    %p78 = scmp.eq.s32.totalorder %s16, 3
    %p79 = por %p77, %p78
    %p81 = scmp.ne.s32.totalorder %s64, %s80
    %p82 = scmp.eq.s32.totalorder %s16, 0
    %p83 = por %p81, %p82
    %s84 = ssub.s32 %s17, %s29
    %s85 = ssub.s32 %s18, %s25
    %s86 = sor.u32 %s84, %s85
    %p87 = scmp.eq.s32.totalorder %s86, 0
    %s89 = sadd.s32 %s88, 1
    %s90 = scalar_select %p87, %s88, %s89
    %p93 = pneg %p87
    %p94 = scmp.eq.s32.totalorder %s10, 3
    %p95 = por %p93, %p94
    %p96 = scmp.ne.s32.totalorder %s88, %s91
    %p97 = scmp.eq.s32.totalorder %s10, 0
    %p98 = por %p96, %p97
    %p99 = scmp.ne.s32.totalorder %s88, %s91
    %p100 = scmp.eq.s32.totalorder %s15, 3
    %p101 = por %p99, %p100
    %p102 = scmp.ne.s32.totalorder %s91, %s92
    %p103 = scmp.eq.s32.totalorder %s15, 0
    %p104 = por %p102, %p103
    %p105 = scmp.ne.s32.totalorder %s91, %s92
    %p106 = scmp.eq.s32.totalorder %s16, 3
    %p107 = por %p105, %p106
    %p109 = scmp.ne.s32.totalorder %s92, %s108
    %p110 = scmp.eq.s32.totalorder %s16, 0
    %p111 = por %p109, %p110
    %s112 = ssub.s32 %s17, %s29
    %s113 = ssub.s32 %s18, %s25
    %s114 = sor.u32 %s112, %s113
    %p115 = scmp.eq.s32.totalorder %s114, 0
    %s117 = sadd.s32 %s116, 1
    %s118 = scalar_select %p115, %s116, %s117
    %p121 = pneg %p115
    %p122 = scmp.eq.s32.totalorder %s10, 3
    %p123 = por %p121, %p122
    %p124 = scmp.ne.s32.totalorder %s116, %s119
    %p125 = scmp.eq.s32.totalorder %s10, 0
    %p126 = por %p124, %p125
    %p127 = scmp.ne.s32.totalorder %s116, %s119
    %p128 = scmp.eq.s32.totalorder %s15, 3
    %p129 = por %p127, %p128
    %p130 = scmp.ne.s32.totalorder %s119, %s120
    %p131 = scmp.eq.s32.totalorder %s15, 0
    %p132 = por %p130, %p131
    %p133 = scmp.ne.s32.totalorder %s119, %s120
    %p134 = scmp.eq.s32.totalorder %s16, 3
    %p135 = por %p133, %p134
    %p137 = scmp.ne.s32.totalorder %s120, %s136
    %p138 = scmp.eq.s32.totalorder %s16, 0
    %p139 = por %p137, %p138
    %s140 = ssub.s32 %s17, %s29
    %s141 = ssub.s32 %s18, %s25
    %s142 = sor.u32 %s140, %s141
    %p143 = scmp.eq.s32.totalorder %s142, 0
    %s145 = sadd.s32 %s144, 1
    %s146 = scalar_select %p143, %s144, %s145
    %p149 = pneg %p143
    %p150 = scmp.eq.s32.totalorder %s10, 3
    %p151 = por %p149, %p150
    %p152 = scmp.ne.s32.totalorder %s144, %s147
    %p153 = scmp.eq.s32.totalorder %s10, 0
    %p154 = por %p152, %p153
    %p155 = scmp.ne.s32.totalorder %s144, %s147
    %p156 = scmp.eq.s32.totalorder %s15, 3
    %p157 = por %p155, %p156
    %p158 = scmp.ne.s32.totalorder %s147, %s148
    %p159 = scmp.eq.s32.totalorder %s15, 0
    %p160 = por %p158, %p159
    %p161 = scmp.ne.s32.totalorder %s147, %s148
    %p162 = scmp.eq.s32.totalorder %s16, 3
    %p163 = por %p161, %p162
    %p165 = scmp.ne.s32.totalorder %s148, %s164
    %p166 = scmp.eq.s32.totalorder %s16, 0
    %p167 = por %p165, %p166
    %p168 = scmp.le.s32.totalorder 1, %s10
    %p169 = scmp.lt.s32.totalorder %s10, 5
    %p170 = pnand %p168, %p169
    %p171 = pneg %p170
    // Predicated region
    $region9: #{mipmap_warp.1} parent=5 // pred_check
      _
    $region10: #{mipmap_warp.1} parent=5 // pred_check_branch
      %173 = sbr.rel (%p170) target = $region12
    $region11: #{mipmap_warp.1} parent=5 // pred_region
      %s174 = ssub.s32 %s10, 1
    $region12: #{mipmap_warp.1} parent=5 // pred_fallthru
      _
    %p175 = scmp.lt.s32.totalorder %s10, 4
    // Predicated region
    $region13: #{mipmap_warp.1} parent=5 // pred_check
      %p176 = pneg %p175
    $region14: #{mipmap_warp.1} parent=5 // pred_check_branch
      %178 = sbr.rel (%p176) target = $region16
    $region15: #{mipmap_warp.1} parent=5 // pred_region
      // Predicated region
      $region17: #{mipmap_warp.1} parent=15 // pred_check
        %p179 = pneg %p42
      $region18: #{mipmap_warp.1} parent=15 // pred_check_branch
        %181 = sbr.rel (%p179) target = $region20
      $region19: #{mipmap_warp.1} parent=15 // pred_region
        %p182 = scmp.lt.s32.totalorder %s17, 1
        %s183 = scalar_select %p182, %s17, 1
        %s184 = smul.addr %s183, 6
        %s185 = smul.addr %s184, 8
        %s186 = scalar_lea.vmem %s0, %s185
      $region20: #{mipmap_warp.1} parent=15 // pred_fallthru
        _
      // Predicated region
      $region21: #{mipmap_warp.1} parent=15 // pred_check
        %p187 = pneg %p70
      $region22: #{mipmap_warp.1} parent=15 // pred_check_branch
        %189 = sbr.rel (%p187) target = $region24
      $region23: #{mipmap_warp.1} parent=15 // pred_region
        %p190 = scmp.lt.s32.totalorder %s17, 1
        %s191 = scalar_select %p190, %s17, 1
        %p192 = scmp.lt.s32.totalorder %s18, 1
        %s193 = scalar_select %p192, %s18, 1
        %s194 = smul.addr %s191, 2
        %s195 = sadd.s32 %s193, %s194
        %s196 = scalar_lea.vmem %s1, %s195
      $region24: #{mipmap_warp.1} parent=15 // pred_fallthru
        _
      // Predicated region
      $region25: #{mipmap_warp.1} parent=15 // pred_check
        %p197 = pneg %p98
      $region26: #{mipmap_warp.1} parent=15 // pred_check_branch
        %199 = sbr.rel (%p197) target = $region28
      $region27: #{mipmap_warp.1} parent=15 // pred_region
        %p200 = scmp.lt.s32.totalorder %s17, 1
        %s201 = scalar_select %p200, %s17, 1
        %p202 = scmp.lt.s32.totalorder %s18, 1
        %s203 = scalar_select %p202, %s18, 1
        %s204 = smul.addr %s201, 2
        %s205 = sadd.s32 %s203, %s204
        %s206 = scalar_lea.vmem %s2, %s205
      $region28: #{mipmap_warp.1} parent=15 // pred_fallthru
        _
      // Predicated region
      $region29: #{mipmap_warp.1} parent=15 // pred_check
        %p207 = pneg %p126
      $region30: #{mipmap_warp.1} parent=15 // pred_check_branch
        %209 = sbr.rel (%p207) target = $region32
      $region31: #{mipmap_warp.1} parent=15 // pred_region
        %p210 = scmp.lt.s32.totalorder %s17, 1
        %s211 = scalar_select %p210, %s17, 1
        %p212 = scmp.lt.s32.totalorder %s18, 1
        %s213 = scalar_select %p212, %s18, 1
        %s214 = smul.addr %s211, 2
        %s215 = sadd.s32 %s213, %s214
        %s216 = scalar_lea.vmem %s3, %s215
      $region32: #{mipmap_warp.1} parent=15 // pred_fallthru
        _
    $region16: #{mipmap_warp.1} parent=5 // pred_fallthru
      _
    %p217 = scmp.le.s32.totalorder 1, %s10
    %p218 = scmp.lt.s32.totalorder %s10, 5
    %p219 = pnand %p217, %p218
    %p220 = pneg %p219
    // Predicated region
    $region33: #{mipmap_warp.1} parent=5 // pred_check
      _
    $region34: #{mipmap_warp.1} parent=5 // pred_check_branch
      %222 = sbr.rel (%p219) target = $region36
    $region35: #{mipmap_warp.1} parent=5 // pred_region
      %s223 = ssub.s32 %s10, 1
      %p224 = scmp.lt.s32.totalorder %s19, 1
      %s225 = scalar_select %p224, %s19, 1
      %s226 = smul.addr %s225, 6
      %s227 = smul.addr %s226, 8
      %s228 = scalar_lea.vmem %s0, %s227
      %p229 = pneg %p48
      %p230 = pneg %p45
      %p231 = scmp.lt.s32.totalorder %s19, 1
      %s232 = scalar_select %p231, %s19, 1
      %p233 = scmp.lt.s32.totalorder %s20, 1
      %s234 = scalar_select %p233, %s20, 1
      %s235 = smul.addr %s232, 2
      %s236 = sadd.s32 %s234, %s235
      %s237 = scalar_lea.vmem %s1, %s236
      %p238 = pneg %p76
      %p239 = pneg %p73
      %p240 = scmp.lt.s32.totalorder %s19, 1
      %s241 = scalar_select %p240, %s19, 1
      %p242 = scmp.lt.s32.totalorder %s20, 1
      %s243 = scalar_select %p242, %s20, 1
      %s244 = smul.addr %s241, 2
      %s245 = sadd.s32 %s243, %s244
      %s246 = scalar_lea.vmem %s2, %s245
      %p247 = pneg %p104
      %p248 = pneg %p101
      %p249 = scmp.lt.s32.totalorder %s19, 1
      %s250 = scalar_select %p249, %s19, 1
      %p251 = scmp.lt.s32.totalorder %s20, 1
      %s252 = scalar_select %p251, %s20, 1
      %s253 = smul.addr %s250, 2
      %s254 = sadd.s32 %s252, %s253
      %s255 = scalar_lea.vmem %s3, %s254
      %p256 = pneg %p132
      %p257 = pneg %p129
      %p258 = pneg %p160
      %p259 = pneg %p157
      %p260 = scmp.lt.s32.totalorder %s19, 1
      %s261 = scalar_select %p260, %s19, 1
      %p262 = scmp.lt.s32.totalorder %s20, 1
      %s263 = scalar_select %p262, %s20, 1
      %s264 = smul.addr %s261, 2
      %s265 = sadd.s32 %s263, %s264
      %s266 = smul.addr %s265, 4
      %s267 = scalar_lea.vmem %s4, %s266
      %p268 = scmp.lt.s32.totalorder %s19, 1
      %s269 = scalar_select %p268, %s19, 1
      %s270 = smul.addr %s269, 6
      %s271 = smul.addr %s270, 8
      %s272 = scalar_lea.vmem %s0, %s271
      %p273 = scmp.lt.s32.totalorder %s19, 1
      %s274 = scalar_select %p273, %s19, 1
      %p275 = scmp.lt.s32.totalorder %s20, 1
      %s276 = scalar_select %p275, %s20, 1
      %s277 = smul.addr %s274, 2
      %s278 = sadd.s32 %s276, %s277
      %s279 = scalar_lea.vmem %s1, %s278
      %p280 = scmp.lt.s32.totalorder %s19, 1
      %s281 = scalar_select %p280, %s19, 1
      %p282 = scmp.lt.s32.totalorder %s20, 1
      %s283 = scalar_select %p282, %s20, 1
      %s284 = smul.addr %s281, 2
      %s285 = sadd.s32 %s283, %s284
      %s286 = scalar_lea.vmem %s2, %s285
      %p287 = scmp.lt.s32.totalorder %s19, 1
      %s288 = scalar_select %p287, %s19, 1
      %p289 = scmp.lt.s32.totalorder %s20, 1
      %s290 = scalar_select %p289, %s20, 1
      %s291 = smul.addr %s288, 2
      %s292 = sadd.s32 %s290, %s291
      %s293 = scalar_lea.vmem %s3, %s292
      %p294 = scmp.lt.s32.totalorder %s19, 1
      %s295 = scalar_select %p294, %s19, 1
      %p296 = scmp.lt.s32.totalorder %s20, 1
      %s297 = scalar_select %p296, %s20, 1
      %s298 = smul.addr %s295, 2
      %s299 = sadd.s32 %s297, %s298
      %s300 = smul.addr %s299, 4
      %s301 = scalar_lea.vmem %s4, %s300
      %v302 = vld [vmem:[%s272] sm:$0xff]
      %v303 = vld [vmem:[%s272 + $0x8] sm:$0xff]
      %v304 = vld [vmem:[%s272 + $0x10] sm:$0xff]
      %v305 = vld [vmem:[%s272 + $0x18] sm:$0xff]
      %v306 = vld [vmem:[%s272 + $0x20] sm:$0xf]
      %v307 = vld [vmem:[%s272 + $0x28] sm:$0xf]
      %v308 = vld [vmem:[%s279] sm:$0x1]
      %v309 = vld [vmem:[%s286] sm:$0x1]
      %v310 = vld [vmem:[%s293] sm:$0x1]
      %v311 = vadd.f32 %v308, 1.0
      %v312 = vmul.f32 %v311, 16.0
      %v313 = vsub.f32 %v312, 1.0
      %v314 = vmul.f32 %v313, 0.5
      %v315 = vmax.f32 %v314, 0.0
      %v316 = vmin.f32 %v315, 15.0
      %v317 = vadd.f32 %v309, 1.0
      %v318 = vmul.f32 %v317, 16.0
      %v319 = vsub.f32 %v318, 1.0
      %v320 = vmul.f32 %v319, 0.5
      %v321 = vmax.f32 %v320, 0.0
      %v322 = vmin.f32 %v321, 15.0
      %v323 = vfloor.f32 %v316
      %v324 = vfloor.f32 %v322
      %v325 = vsub.f32 %v316, %v323
      %v326 = vsub.f32 %v322, %v324
      %v327 = vcvt.f32.s32.to.zero.pseudo %v323
      %v328 = vcvt.f32.s32.to.zero.pseudo %v324
      %v329 = vlaneseq
      %v330 = vshrl.u32 %v329, 7
      %v331 = vadd.s32 %v330, 8
      %v332 = vlaneseq
      %v333 = vshrl.u32 %v332, 7
      %v334 = vsub.s32 0, %v333
      %v335 = vrot.slane %v327, %v334
      %vm336 = vcmp.eq.s32.totalorder %v330, %v335
      %vm337 = vcmp.eq.s32.totalorder %v331, %v335
      %v338 = vsub.f32 1.0, %v325
      %v340 = vlaneseq
      %v341 = vshrl.u32 %v340, 7
      %v342 = vsub.s32 0, %v341
      %v343 = vrot.slane %v338, %v342
      %v345 = vsel %vm336, %v343, 0.0
      %v346 = vsel %vm337, %v343, 0.0
      %v347 = vadd.s32 %v327, 1
      %v348 = vlaneseq
      %v349 = vshrl.u32 %v348, 7
      %v350 = vsub.s32 0, %v349
      %v351 = vrot.slane %v347, %v350
      %vm352 = vcmp.eq.s32.totalorder %v330, %v351
      %vm353 = vcmp.eq.s32.totalorder %v331, %v351
      %v355 = vlaneseq
      %v356 = vshrl.u32 %v355, 7
      %v357 = vsub.s32 0, %v356
      %v358 = vrot.slane %v325, %v357
      %v360 = vsel %vm352, %v358, 0.0
      %v361 = vsel %vm353, %v358, 0.0
      %v362 = vadd.f32 %v345, %v360
      %v363 = vadd.f32 %v346, %v361
      %v364 = vlaneseq
      %v365 = vshrl.u32 %v364, 7
      %v366 = vsub.s32 0, %v365
      %v367 = vrot.slane %v328, %v366
      %vm368 = vcmp.eq.s32.totalorder %v330, %v367
      %vm369 = vcmp.eq.s32.totalorder %v331, %v367
      %v370 = vsub.f32 1.0, %v326
      %v372 = vlaneseq
      %v373 = vshrl.u32 %v372, 7
      %v374 = vsub.s32 0, %v373
      %v375 = vrot.slane %v370, %v374
      %v377 = vsel %vm368, %v375, 0.0
      %v378 = vsel %vm369, %v375, 0.0
      %v379 = vadd.s32 %v328, 1
      %v380 = vlaneseq
      %v381 = vshrl.u32 %v380, 7
      %v382 = vsub.s32 0, %v381
      %v383 = vrot.slane %v379, %v382
      %vm384 = vcmp.eq.s32.totalorder %v330, %v383
      %vm385 = vcmp.eq.s32.totalorder %v331, %v383
      %v387 = vlaneseq
      %v388 = vshrl.u32 %v387, 7
      %v389 = vsub.s32 0, %v388
      %v390 = vrot.slane %v326, %v389
      %v392 = vsel %vm384, %v390, 0.0
      %v393 = vsel %vm385, %v390, 0.0
      %v394 = vadd.f32 %v377, %v392
      %v395 = vadd.f32 %v378, %v393
      %v398 = vcombine.high %v394, %v394
      %v400 = vunpack.c.l.s4 1966171168
      %v401 = vunpack.c.0.s8 %v400
      %v402 = vlaneseq
      %v403 = vshrl.u32 %v402, 7
      %v404 = vsub.s32 %v401, %v403
      %v405 = vrot.slane %v394, %v404
      %v407 = vunpack.c.l.s4 1966171168
      %v408 = vunpack.c.0.s8 %v407
      %v409 = vlaneseq
      %v410 = vshrl.u32 %v409, 7
      %v411 = vsub.s32 %v408, %v410
      %v412 = vrot.slane %v398, %v411
      %v413 = vcombine.high %v405, %v405
      %v414 = vcombine.high %v412, %v412
      %v416 = vunpack.c.l.s4 1966171168
      %v417 = vunpack.c.0.s8 %v416
      %v418 = vlaneseq
      %v419 = vshrl.u32 %v418, 7
      %v420 = vsub.s32 %v417, %v419
      %v421 = vrot.slane %v405, %v420
      %v423 = vunpack.c.l.s4 1966171168
      %v424 = vunpack.c.0.s8 %v423
      %v425 = vlaneseq
      %v426 = vshrl.u32 %v425, 7
      %v427 = vsub.s32 %v424, %v426
      %v428 = vrot.slane %v412, %v427
      %v430 = vunpack.c.l.s4 1966171168
      %v431 = vunpack.c.0.s8 %v430
      %v432 = vlaneseq
      %v433 = vshrl.u32 %v432, 7
      %v434 = vsub.s32 %v431, %v433
      %v435 = vrot.slane %v413, %v434
      %v437 = vunpack.c.l.s4 1966171168
      %v438 = vunpack.c.0.s8 %v437
      %v439 = vlaneseq
      %v440 = vshrl.u32 %v439, 7
      %v441 = vsub.s32 %v438, %v440
      %v442 = vrot.slane %v414, %v441
      %v443 = vcombine.high %v421, %v421
      %v444 = vcombine.high %v428, %v428
      %v445 = vcombine.high %v435, %v435
      %v446 = vcombine.high %v442, %v442
      %v447 = vcombine.high %v395, %v395
      %v449 = vunpack.c.l.s4 1966171168
      %v450 = vunpack.c.0.s8 %v449
      %v451 = vlaneseq
      %v452 = vshrl.u32 %v451, 7
      %v453 = vsub.s32 %v450, %v452
      %v454 = vrot.slane %v395, %v453
      %v456 = vunpack.c.l.s4 1966171168
      %v457 = vunpack.c.0.s8 %v456
      %v458 = vlaneseq
      %v459 = vshrl.u32 %v458, 7
      %v460 = vsub.s32 %v457, %v459
      %v461 = vrot.slane %v447, %v460
      %v462 = vcombine.high %v454, %v454
      %v463 = vcombine.high %v461, %v461
      %v465 = vunpack.c.l.s4 1966171168
      %v466 = vunpack.c.0.s8 %v465
      %v467 = vlaneseq
      %v468 = vshrl.u32 %v467, 7
      %v469 = vsub.s32 %v466, %v468
      %v470 = vrot.slane %v454, %v469
      %v472 = vunpack.c.l.s4 1966171168
      %v473 = vunpack.c.0.s8 %v472
      %v474 = vlaneseq
      %v475 = vshrl.u32 %v474, 7
      %v476 = vsub.s32 %v473, %v475
      %v477 = vrot.slane %v461, %v476
      %v479 = vunpack.c.l.s4 1966171168
      %v480 = vunpack.c.0.s8 %v479
      %v481 = vlaneseq
      %v482 = vshrl.u32 %v481, 7
      %v483 = vsub.s32 %v480, %v482
      %v484 = vrot.slane %v462, %v483
      %v486 = vunpack.c.l.s4 1966171168
      %v487 = vunpack.c.0.s8 %v486
      %v488 = vlaneseq
      %v489 = vshrl.u32 %v488, 7
      %v490 = vsub.s32 %v487, %v489
      %v491 = vrot.slane %v463, %v490
      %v492 = vcombine.high %v470, %v470
      %v493 = vcombine.high %v477, %v477
      %v494 = vcombine.high %v484, %v484
      %v495 = vcombine.high %v491, %v491
      %v496 = vlaneseq
      %v497 = vshrl.u32 %v496, 7
      %v498 = vsub.s32 0, %v497
      %v499 = vrot.slane %v421, %v498
      %v500 = vlaneseq
      %v501 = vshrl.u32 %v500, 7
      %v502 = vsub.s32 0, %v501
      %v503 = vrot.slane %v435, %v502
      %v504 = vlaneseq
      %v505 = vshrl.u32 %v504, 7
      %v506 = vsub.s32 0, %v505
      %v507 = vrot.slane %v443, %v506
      %v508 = vlaneseq
      %v509 = vshrl.u32 %v508, 7
      %v510 = vsub.s32 0, %v509
      %v511 = vrot.slane %v445, %v510
      %v512 = vlaneseq
      %v513 = vshrl.u32 %v512, 7
      %v514 = vsub.s32 0, %v513
      %v515 = vrot.slane %v428, %v514
      %v516 = vlaneseq
      %v517 = vshrl.u32 %v516, 7
      %v518 = vsub.s32 0, %v517
      %v519 = vrot.slane %v442, %v518
      %v520 = vlaneseq
      %v521 = vshrl.u32 %v520, 7
      %v522 = vsub.s32 0, %v521
      %v523 = vrot.slane %v444, %v522
      %v524 = vlaneseq
      %v525 = vshrl.u32 %v524, 7
      %v526 = vsub.s32 0, %v525
      %v527 = vrot.slane %v446, %v526
      %v528 = vlaneseq
      %v529 = vshrl.u32 %v528, 7
      %v530 = vsub.s32 0, %v529
      %v531 = vrot.slane %v470, %v530
      %v532 = vlaneseq
      %v533 = vshrl.u32 %v532, 7
      %v534 = vsub.s32 0, %v533
      %v535 = vrot.slane %v484, %v534
      %v536 = vlaneseq
      %v537 = vshrl.u32 %v536, 7
      %v538 = vsub.s32 0, %v537
      %v539 = vrot.slane %v492, %v538
      %v540 = vlaneseq
      %v541 = vshrl.u32 %v540, 7
      %v542 = vsub.s32 0, %v541
      %v543 = vrot.slane %v494, %v542
      %v544 = vlaneseq
      %v545 = vshrl.u32 %v544, 7
      %v546 = vsub.s32 0, %v545
      %v547 = vrot.slane %v477, %v546
      %v548 = vlaneseq
      %v549 = vshrl.u32 %v548, 7
      %v550 = vsub.s32 0, %v549
      %v551 = vrot.slane %v491, %v550
      %v552 = vlaneseq
      %v553 = vshrl.u32 %v552, 7
      %v554 = vsub.s32 0, %v553
      %v555 = vrot.slane %v493, %v554
      %v556 = vlaneseq
      %v557 = vshrl.u32 %v556, 7
      %v558 = vsub.s32 0, %v557
      %v559 = vrot.slane %v495, %v558
      %v576 = vmul.f32 %v499, %v362
      %v577 = vmul.f32 %v499, %v363
      %v578 = vmul.f32 %v503, %v362
      %v579 = vmul.f32 %v503, %v363
      %v580 = vmul.f32 %v507, %v362
      %v581 = vmul.f32 %v507, %v363
      %v582 = vmul.f32 %v511, %v362
      %v583 = vmul.f32 %v511, %v363
      %v584 = vmul.f32 %v515, %v362
      %v585 = vmul.f32 %v515, %v363
      %v586 = vmul.f32 %v519, %v362
      %v587 = vmul.f32 %v519, %v363
      %v588 = vmul.f32 %v523, %v362
      %v589 = vmul.f32 %v523, %v363
      %v590 = vmul.f32 %v527, %v362
      %v591 = vmul.f32 %v527, %v363
      %v592 = vmul.f32 %v531, %v362
      %v593 = vmul.f32 %v531, %v363
      %v594 = vmul.f32 %v535, %v362
      %v595 = vmul.f32 %v535, %v363
      %v596 = vmul.f32 %v539, %v362
      %v597 = vmul.f32 %v539, %v363
      %v598 = vmul.f32 %v543, %v362
      %v599 = vmul.f32 %v543, %v363
      %v600 = vmul.f32 %v547, %v362
      %v601 = vmul.f32 %v547, %v363
      %v602 = vmul.f32 %v551, %v362
      %v603 = vmul.f32 %v551, %v363
      %v604 = vmul.f32 %v555, %v362
      %v605 = vmul.f32 %v555, %v363
      %v606 = vmul.f32 %v559, %v362
      %v607 = vmul.f32 %v559, %v363
      %608 = vmatprep.subr.mxu0 0.0
      %609 = vmatpush1.msra.mxu0 %v591
      %610 = vmatprep.subr.mxu0 0.0
      %611 = vmatpush1.msra.mxu0 %v590
      %612 = vmatprep.subr.mxu0 0.0
      %613 = vmatpush1.msra.mxu0 %v589
      %614 = vmatprep.subr.mxu0 0.0
      %615 = vmatpush1.msra.mxu0 %v588
      %616 = vmatprep.subr.mxu0 0.0
      %617 = vmatpush1.msra.mxu0 %v587
      %618 = vmatprep.subr.mxu0 0.0
      %619 = vmatpush1.msra.mxu0 %v586
      %620 = vmatprep.subr.mxu0 0.0
      %621 = vmatpush1.msra.mxu0 %v585
      %622 = vmatprep.subr.mxu0 0.0
      %623 = vmatpush1.msra.mxu0 %v584
      %624 = vmatprep.subr.mxu0 0.0
      %625 = vmatpush1.msra.mxu0 %v583
      %626 = vmatprep.subr.mxu0 0.0
      %627 = vmatpush1.msra.mxu0 %v582
      %628 = vmatprep.subr.mxu0 0.0
      %629 = vmatpush1.msra.mxu0 %v581
      %630 = vmatprep.subr.mxu0 0.0
      %631 = vmatpush1.msra.mxu0 %v580
      %632 = vmatprep.subr.mxu0 0.0
      %633 = vmatpush1.msra.mxu0 %v579
      %634 = vmatprep.subr.mxu0 0.0
      %635 = vmatpush1.msra.mxu0 %v578
      %636 = vmatprep.subr.mxu0 0.0
      %637 = vmatpush1.msra.mxu0 %v577
      %638 = vmatprep.subr.mxu0 0.0
      %639 = vmatpush1.msra.mxu0 %v576
      %640 = vmatprep.subr.mxu0 0.0
      %641 = vmatpush2.msra.mxu0 %v607
      %642 = vmatprep.subr.mxu0 0.0
      %643 = vmatpush2.msra.mxu0 %v606
      %644 = vmatprep.subr.mxu0 0.0
      %645 = vmatpush2.msra.mxu0 %v605
      %646 = vmatprep.subr.mxu0 0.0
      %647 = vmatpush2.msra.mxu0 %v604
      %648 = vmatprep.subr.mxu0 0.0
      %649 = vmatpush2.msra.mxu0 %v603
      %650 = vmatprep.subr.mxu0 0.0
      %651 = vmatpush2.msra.mxu0 %v602
      %652 = vmatprep.subr.mxu0 0.0
      %653 = vmatpush2.msra.mxu0 %v601
      %654 = vmatprep.subr.mxu0 0.0
      %655 = vmatpush2.msra.mxu0 %v600
      %656 = vmatprep.subr.mxu0 0.0
      %657 = vmatpush2.msra.mxu0 %v599
      %658 = vmatprep.subr.mxu0 0.0
      %659 = vmatpush2.msra.mxu0 %v598
      %660 = vmatprep.subr.mxu0 0.0
      %661 = vmatpush2.msra.mxu0 %v597
      %662 = vmatprep.subr.mxu0 0.0
      %663 = vmatpush2.msra.mxu0 %v596
      %664 = vmatprep.subr.mxu0 0.0
      %665 = vmatpush2.msra.mxu0 %v595
      %666 = vmatprep.subr.mxu0 0.0
      %667 = vmatpush2.msra.mxu0 %v594
      %668 = vmatprep.subr.mxu0 0.0
      %669 = vmatpush2.msra.mxu0 %v593
      %670 = vmatprep.subr.mxu0 0.0
      %671 = vmatpush2.msra.mxu0 %v592
      %672 = vmatprep.mubr.f32.mxu0 %v303
      %673 = vmatmul.mubr.f32.gmra.mxu0 %v302
      %v674 = vpop.f32.mrf.mxu0
      %v675 = vadd.f32 0.0, %v674
      %v676 = vpop.f32.mrf.mxu0
      %677 = vmatprep.mubr.f32.mxu0 %v305
      %678 = vmatmul.mubr.f32.gmra.mxu0 %v304
      %v679 = vpop.f32.mrf.mxu0
      %v680 = vadd.f32 0.0, %v679
      %v681 = vpop.f32.mrf.mxu0
      %682 = vmatprep.mubr.f32.mxu0 %v307
      %683 = vmatmul.mubr.f32.gmra.mxu0 %v306
      %v684 = vpop.f32.mrf.mxu0
      %v685 = vadd.f32 0.0, %v684
      %v686 = vpop.f32.mrf.mxu0
      %687 = vdwg.mxu0
      %v688 = vmax.f32 %v310, 0.0
      %v689 = vmin.f32 %v688, 4.0
      %v690 = vand.u32 2147483647, %v689
      %v691 = vsub.f32 1.0, %v690
      %v692 = vmax.f32 %v691, 0.0
      %v694 = vlaneseq
      %v695 = vshrl.u32 %v694, 7
      %v696 = vsub.s32 0, %v695
      %v697 = vrot.slane %v692, %v696
      %v699 = vmul.f32 %v697, %v675
      %v700 = vadd.f32 %v699, 0.0
      %v701 = vsub.f32 %v689, 1.0
      %v702 = vand.u32 2147483647, %v701
      %v703 = vsub.f32 1.0, %v702
      %v704 = vmax.f32 %v703, 0.0
      %v706 = vlaneseq
      %v707 = vshrl.u32 %v706, 7
      %v708 = vsub.s32 0, %v707
      %v709 = vrot.slane %v704, %v708
      %v711 = vmul.f32 %v709, %v675
      %v713 = vrot.slane %v711, 4
      %v715 = vadd.f32 %v700, %v713
      %v716 = vsub.f32 %v689, 2.0
      %v717 = vand.u32 2147483647, %v716
      %v718 = vsub.f32 1.0, %v717
      %v719 = vmax.f32 %v718, 0.0
      %v721 = vlaneseq
      %v722 = vshrl.u32 %v721, 7
      %v723 = vsub.s32 0, %v722
      %v724 = vrot.slane %v719, %v723
      %v726 = vmul.f32 %v724, %v680
      %v727 = vadd.f32 %v715, %v726
      %v728 = vsub.f32 %v689, 3.0
      %v729 = vand.u32 2147483647, %v728
      %v730 = vsub.f32 1.0, %v729
      %v731 = vmax.f32 %v730, 0.0
      %v733 = vlaneseq
      %v734 = vshrl.u32 %v733, 7
      %v735 = vsub.s32 0, %v734
      %v736 = vrot.slane %v731, %v735
      %v738 = vmul.f32 %v736, %v680
      %v740 = vrot.slane %v738, 4
      %v742 = vadd.f32 %v727, %v740
      %v743 = vsub.f32 %v689, 4.0
      %v744 = vand.u32 2147483647, %v743
      %v745 = vsub.f32 1.0, %v744
      %v746 = vmax.f32 %v745, 0.0
      %v748 = vlaneseq
      %v749 = vshrl.u32 %v748, 7
      %v750 = vsub.s32 0, %v749
      %v751 = vrot.slane %v746, %v750
      %v753 = vmul.f32 %v751, %v685
      %v754 = vadd.f32 %v742, %v753
      %755 = vst [vmem:[%s301] sm:$0xf] %v754
      %p756 = scmp.lt.s32.totalorder %s19, 1
      %s757 = scalar_select %p756, %s19, 1
      %p758 = scmp.lt.s32.totalorder %s20, 1
      %s759 = scalar_select %p758, %s20, 1
      %s760 = smul.addr %s757, 2
      %s761 = sadd.s32 %s759, %s760
      %s762 = smul.addr %s761, 4
      %s763 = scalar_lea.vmem %s4, %s762
      // Predicated region
      $region37: #{mipmap_warp.1} parent=35 // pred_check
        %p764 = pneg %p157
      $region38: #{mipmap_warp.1} parent=35 // pred_check_branch
        %766 = sbr.rel (%p764) target = $region40
      $region39: #{mipmap_warp.1} parent=35 // pred_region
        _
      $region40: #{mipmap_warp.1} parent=35 // pred_fallthru
        _
    $region36: #{mipmap_warp.1} parent=5 // pred_fallthru
      _
    %p767 = scmp.le.s32.totalorder 2, %s10
    // Predicated region
    $region41: #{mipmap_warp.1} parent=5 // pred_check
      %p768 = pneg %p767
    $region42: #{mipmap_warp.1} parent=5 // pred_check_branch
      %770 = sbr.rel (%p768) target = $region44
    $region43: #{mipmap_warp.1} parent=5 // pred_region
      %s771 = ssub.s32 %s10, 2
      // Predicated region
      $region45: #{mipmap_warp.1} parent=43 // pred_check
        %p772 = pneg %p163
      $region46: #{mipmap_warp.1} parent=43 // pred_check_branch
        %774 = sbr.rel (%p772) target = $region48
      $region47: #{mipmap_warp.1} parent=43 // pred_region
        %p775 = scmp.lt.s32.totalorder %s21, 1
        %s776 = scalar_select %p775, %s21, 1
        %p777 = scmp.lt.s32.totalorder %s22, 1
        %s778 = scalar_select %p777, %s22, 1
        %s779 = smul.addr %s776, 2
        %s780 = sadd.s32 %s778, %s779
        %s781 = smul.addr %s780, 4
        %s782 = scalar_lea.vmem %s4, %s781
      $region48: #{mipmap_warp.1} parent=43 // pred_fallthru
        _
    $region44: #{mipmap_warp.1} parent=5 // pred_fallthru
      _
  $region6: #{mipmap_warp.1} parent=0 // loop_footer
    %s14 = sadd.s32 1, %s10
  $region7: #{mipmap_warp.1} parent=0 // loop_footer_branch
    %9 = sbr.rel target = $region3
  $region8: #{mipmap_warp.1} parent=0 // loop_exit
    _

</llo_original>
